<compile_context>
chip_gen: v7x
topology: tpu7x:2x2x1
jax: 0.10.0
libtpu: 0.0.40
codegen_flags: <defaults>
</compile_context>

<pallas_src>
import numpy as np
import jax
import jax.numpy as jnp
from jax import lax
from jax.experimental import pallas as pl
from jax.experimental.pallas import tpu as pltpu

BN_EPS = 1e-5


def _make_conv_relu_stats_kernel(tile_m, m_valid, m_padded):
    """Pass 1: y = relu(W @ patchesT + b); also emit per-tile channel sum/sumsq."""
    has_pad = m_padded != m_valid

    def kernel(w_ref, b_ref, p_ref, y_ref, sum_ref, sq_ref):
        # w_ref: (Cout, K)  p_ref: (K, TILE_M)  b_ref: (Cout, 1) f32
        y = jnp.dot(w_ref[...], p_ref[...], preferred_element_type=jnp.float32)
        y = jnp.maximum(y + b_ref[...], 0.0)          # bias + ReLU, f32
        y_ref[...] = y
        if has_pad:  # mask padded M columns out of the batch statistics
            col = (pl.program_id(0) * tile_m
                   + lax.broadcasted_iota(jnp.int32, y.shape, 1))
            y = jnp.where(col < m_valid, y, 0.0)
        # Per-channel partial sums; reduction is along the lane axis (XLU).
        sum_ref[...] = jnp.sum(y, axis=1, keepdims=True)[None]     # (1, Cout, 1)
        sq_ref[...] = jnp.sum(y * y, axis=1, keepdims=True)[None]  # (1, Cout, 1)

    return kernel


def _bn_apply_kernel(scale_ref, shift_ref, y_ref, out_ref):
    """Pass 2: out = y * scale + shift (global batch-norm folded to scale/shift)."""
    out_ref[...] = y_ref[...] * scale_ref[...] + shift_ref[...]


def _pick_tile_m(m):
    tile = min(1024, ((m + 127) // 128) * 128)       # multiple of 128, <= 1024 rows
    m_padded = ((m + tile - 1) // tile) * tile
    return tile, m_padded


def conv_layer_forward(x_nchw, w_oihw, bias, gamma=None, beta=None, *,
                       stride=1, padding=1, compute_dtype=jnp.bfloat16):
    N, Cin, H, W = x_nchw.shape
    Cout, _, KH, KW = w_oihw.shape
    Ho = (H + 2 * padding - KH) // stride + 1
    Wo = (W + 2 * padding - KW) // stride + 1
    K = KH * KW * Cin
    M = N * Ho * Wo
    TILE_M, Mp = _pick_tile_m(M)
    G = Mp // TILE_M

    # --- glue (XLA): transposed, unpadded-K im2col (K, M); MXU operands in bf16 ---
    x = x_nchw.astype(jnp.float32)
    xp = jnp.pad(x, ((0, 0), (0, 0), (padding, padding), (padding, padding)))
    taps = []
    for i in range(KH):
        for j in range(KW):
            xs = xp[:, :, i:i + Ho * stride:stride, j:j + Wo * stride:stride]
            taps.append(jnp.transpose(xs, (1, 0, 2, 3)).reshape(Cin, M))
    patches_t = jnp.concatenate(taps, axis=0)                        # (K, M)
    if Mp != M:
        patches_t = jnp.pad(patches_t, ((0, 0), (0, Mp - M)))
    patches_t = patches_t.astype(compute_dtype)

    w2d = jnp.transpose(w_oihw, (0, 2, 3, 1)).reshape(Cout, K).astype(compute_dtype)
    b2d = bias.reshape(Cout, 1).astype(jnp.float32)

    itemsize = jnp.dtype(compute_dtype).itemsize
    cost1 = pl.CostEstimate(
        flops=2 * Cout * K * Mp,
        transcendentals=0,
        bytes_accessed=(K * Mp + Cout * K) * itemsize + Cout * Mp * 4)

    y, psum, psq = pl.pallas_call(
        _make_conv_relu_stats_kernel(TILE_M, M, Mp),
        out_shape=(jax.ShapeDtypeStruct((Cout, Mp), jnp.float32),
                   jax.ShapeDtypeStruct((G, Cout, 1), jnp.float32),
                   jax.ShapeDtypeStruct((G, Cout, 1), jnp.float32)),
        grid=(G,),
        in_specs=[
            pl.BlockSpec((Cout, K), lambda i: (0, 0)),      # weights (resident)
            pl.BlockSpec((Cout, 1), lambda i: (0, 0)),      # bias    (resident)
            pl.BlockSpec((K, TILE_M), lambda i: (0, i)),    # patch tile (pipelined)
        ],
        out_specs=(
            pl.BlockSpec((Cout, TILE_M), lambda i: (0, i)), # lane-dense output
            pl.BlockSpec((1, Cout, 1), lambda i: (i, 0, 0)),
            pl.BlockSpec((1, Cout, 1), lambda i: (i, 0, 0)),
        ),
        compiler_params=pltpu.CompilerParams(
            dimension_semantics=("parallel",),
            vmem_limit_bytes=32 * 1024 * 1024),
        cost_estimate=cost1,
    )(w2d, b2d, patches_t)

    # --- fold GLOBAL training-mode batch stats into per-channel scale/shift ---
    if gamma is None:
        gamma = jnp.ones((Cout,), jnp.float32)
    if beta is None:
        beta = jnp.zeros((Cout,), jnp.float32)
    total = jnp.sum(psum, axis=0).reshape(Cout)
    total_sq = jnp.sum(psq, axis=0).reshape(Cout)
    mean = total / M
    var = jnp.maximum(total_sq / M - mean * mean, 0.0)     # biased batch variance
    inv = lax.rsqrt(var + BN_EPS)
    g32 = gamma.astype(jnp.float32)
    scale = (g32 * inv).reshape(Cout, 1)
    shift = (beta.astype(jnp.float32) - mean * g32 * inv).reshape(Cout, 1)

    out_t = pl.pallas_call(
        _bn_apply_kernel,
        out_shape=jax.ShapeDtypeStruct((Cout, Mp), jnp.float32),
        grid=(G,),
        in_specs=[
            pl.BlockSpec((Cout, 1), lambda i: (0, 0)),
            pl.BlockSpec((Cout, 1), lambda i: (0, 0)),
            pl.BlockSpec((Cout, TILE_M), lambda i: (0, i)),
        ],
        out_specs=pl.BlockSpec((Cout, TILE_M), lambda i: (0, i)),
        compiler_params=pltpu.CompilerParams(
            dimension_semantics=("parallel",),
            vmem_limit_bytes=32 * 1024 * 1024),
    )(scale, shift, y)

    # back to NCHW (drop any padded columns first)
    out = out_t[:, :M].reshape(Cout, N, Ho, Wo)
    return jnp.transpose(out, (1, 0, 2, 3))


def reference_forward(x_nchw, w_oihw, bias):
    y = lax.conv_general_dilated(
        x_nchw.astype(jnp.float32), w_oihw.astype(jnp.float32),
        window_strides=(1, 1), padding=((1, 1), (1, 1)),
        dimension_numbers=('NCHW', 'OIHW', 'NCHW'))
    y = y + bias[None, :, None, None]
    y = jnp.maximum(y, 0.0)
    mean = jnp.mean(y, axis=(0, 2, 3), keepdims=True)
    var = jnp.mean((y - mean) ** 2, axis=(0, 2, 3), keepdims=True)
    return (y - mean) * lax.rsqrt(var + BN_EPS)


if __name__ == "__main__":
    # ConvLayer(num_inputs=4, num_filters=8): kernel_size=3, stride=1,
    # padding=(3-1)//2=1, bn=True, transpose=False.
    N, Cin, H, W = 2, 4, 16, 16
    Cout, KH, KW = 8, 3, 3

    key = jax.random.PRNGKey(0)
    kx, kw, kb = jax.random.split(key, 3)

    x = jax.random.normal(kx, (N, Cin, H, W), dtype=jnp.float32)

    # kaiming_uniform_(a=sqrt(5)) -> U(-1/sqrt(fan_in), 1/sqrt(fan_in)); bias same bound.
    fan_in = Cin * KH * KW
    bound = 1.0 / np.sqrt(fan_in)
    w = jax.random.uniform(kw, (Cout, Cin, KH, KW), minval=-bound, maxval=bound,
                           dtype=jnp.float32)
    b = jax.random.uniform(kb, (Cout,), minval=-bound, maxval=bound,
                           dtype=jnp.float32)

    ref = jax.block_until_ready(reference_forward(x, w, b))

    # f32 MXU operands: tight parity with the f32 reference (validates structure).
    out_f32 = jax.block_until_ready(
        conv_layer_forward(x, w, b, compute_dtype=jnp.float32))
    np.testing.assert_allclose(np.asarray(out_f32), np.asarray(ref),
                               rtol=1e-4, atol=1e-4)

    # bf16 MXU operands (perf-review default path): looser tolerance for the cast.
    out_bf16 = jax.block_until_ready(conv_layer_forward(x, w, b))
    np.testing.assert_allclose(np.asarray(out_bf16), np.asarray(ref),
                               rtol=5e-2, atol=5e-2)

    print("KERNEL_OK")
</pallas_src>

<mosaic_0001>
module attributes {stable_mosaic.version = 11 : i64} {
  func.func @kernel(%arg0: i32, %arg1: memref<8x36xf32, #tpu.memory_space<vmem>>, %arg2: memref<8x1xf32, #tpu.memory_space<vmem>>, %arg3: memref<36x512xf32, #tpu.memory_space<vmem>>, %arg4: memref<8x512xf32, #tpu.memory_space<vmem>>, %arg5: memref<1x8x1xf32, #tpu.memory_space<vmem>>, %arg6: memref<1x8x1xf32, #tpu.memory_space<vmem>>) attributes {dimension_semantics = [#tpu.dimension_semantics<parallel>], iteration_bounds = array<i64: 1>, scalar_prefetch = 0 : i64, scratch_operands = 0 : i64, tpu.core_type = #tpu.core_type<tc>, window_params = [{pipeline_mode = #tpu.pipeline_mode<synchronous>, transform_indices = @transform_0, window_bounds = array<i64: 8, 36>}, {pipeline_mode = #tpu.pipeline_mode<synchronous>, transform_indices = @transform_1, window_bounds = array<i64: 8, 1>}, {transform_indices = @transform_2, window_bounds = array<i64: 36, 512>}, {transform_indices = @transform_3, window_bounds = array<i64: 8, 512>}, {transform_indices = @transform_4, window_bounds = array<i64: 1, 8, 1>}, {transform_indices = @transform_5, window_bounds = array<i64: 1, 8, 1>}]} {
    %c0 = arith.constant 0 : index
    %c0_0 = arith.constant 0 : index
    %0 = vector.load %arg1[%c0, %c0_0] : memref<8x36xf32, #tpu.memory_space<vmem>>, vector<8x36xf32>
    %c0_1 = arith.constant 0 : index
    %c0_2 = arith.constant 0 : index
    %1 = vector.load %arg3[%c0_1, %c0_2] : memref<36x512xf32, #tpu.memory_space<vmem>>, vector<36x512xf32>
    %cst = arith.constant dense<0.000000e+00> : vector<8x512xf32>
    %2 = tpu.matmul %0, %1, %cst {dimension_numbers = #tpu.dot_dimension_numbers<[1], [0], [0], [1], [0, 0, 1, 1], [], []>} : vector<8x36xf32>, vector<36x512xf32>, vector<8x512xf32> -> vector<8x512xf32>
    %c0_3 = arith.constant 0 : index
    %c0_4 = arith.constant 0 : index
    %3 = vector.load %arg2[%c0_3, %c0_4] : memref<8x1xf32, #tpu.memory_space<vmem>>, vector<8x1xf32>
    %4 = vector.broadcast %3 : vector<8x1xf32> to vector<8x512xf32>
    %5 = arith.addf %2, %4 : vector<8x512xf32>
    %cst_5 = arith.constant 0.000000e+00 : f32
    %6 = vector.broadcast %cst_5 : f32 to vector<8x512xf32>
    %7 = arith.maximumf %5, %6 : vector<8x512xf32>
    %c0_6 = arith.constant 0 : index
    %c0_7 = arith.constant 0 : index
    %8 = vector.load %arg4[%c0_6, %c0_7] : memref<8x512xf32, #tpu.memory_space<vmem>>, vector<8x512xf32>
    tpu.vector_store %arg4[%c0_6, %c0_7], %7 {strides = array<i32>} : memref<8x512xf32, #tpu.memory_space<vmem>>, vector<8x512xf32>,
    %cst_8 = arith.constant dense<0.000000e+00> : vector<8xf32>
    %9 = vector.multi_reduction <add>, %7, %cst_8 [1] : vector<8x512xf32> to vector<8xf32>
    %10 = vector.shape_cast %9 : vector<8xf32> to vector<8x1xf32>
    %11 = vector.shape_cast %10 : vector<8x1xf32> to vector<1x8x1xf32>
    %c0_9 = arith.constant 0 : index
    %c0_10 = arith.constant 0 : index
    %c0_11 = arith.constant 0 : index
    %12 = vector.load %arg5[%c0_9, %c0_10, %c0_11] : memref<1x8x1xf32, #tpu.memory_space<vmem>>, vector<1x8x1xf32>
    tpu.vector_store %arg5[%c0_9, %c0_10, %c0_11], %11 {strides = array<i32>} : memref<1x8x1xf32, #tpu.memory_space<vmem>>, vector<1x8x1xf32>,
    %13 = arith.mulf %7, %7 : vector<8x512xf32>
    %cst_12 = arith.constant dense<0.000000e+00> : vector<8xf32>
    %14 = vector.multi_reduction <add>, %13, %cst_12 [1] : vector<8x512xf32> to vector<8xf32>
    %15 = vector.shape_cast %14 : vector<8xf32> to vector<8x1xf32>
    %16 = vector.shape_cast %15 : vector<8x1xf32> to vector<1x8x1xf32>
    %c0_13 = arith.constant 0 : index
    %c0_14 = arith.constant 0 : index
    %c0_15 = arith.constant 0 : index
    %17 = vector.load %arg6[%c0_13, %c0_14, %c0_15] : memref<1x8x1xf32, #tpu.memory_space<vmem>>, vector<1x8x1xf32>
    tpu.vector_store %arg6[%c0_13, %c0_14, %c0_15], %16 {strides = array<i32>} : memref<1x8x1xf32, #tpu.memory_space<vmem>>, vector<1x8x1xf32>,
    return
  }
  func.func @transform_0(%arg0: i32) -> (i32, i32) {
    %c0_i32 = arith.constant 0 : i32
    %c0_i32_0 = arith.constant 0 : i32
    %c0_i32_1 = arith.constant 0 : i32
    return %c0_i32, %c0_i32_0 : i32, i32
  }
  func.func @transform_1(%arg0: i32) -> (i32, i32) {
    %c0_i32 = arith.constant 0 : i32
    %c0_i32_0 = arith.constant 0 : i32
    %c0_i32_1 = arith.constant 0 : i32
    return %c0_i32, %c0_i32_0 : i32, i32
  }
  func.func @transform_2(%arg0: i32) -> (i32, i32) {
    %c0_i32 = arith.constant 0 : i32
    %c0_i32_0 = arith.constant 0 : i32
    return %c0_i32, %arg0 : i32, i32
  }
  func.func @transform_3(%arg0: i32) -> (i32, i32) {
    %c0_i32 = arith.constant 0 : i32
    %c0_i32_0 = arith.constant 0 : i32
    return %c0_i32, %arg0 : i32, i32
  }
  func.func @transform_4(%arg0: i32) -> (i32, i32, i32) {
    %c0_i32 = arith.constant 0 : i32
    %c0_i32_0 = arith.constant 0 : i32
    %c0_i32_1 = arith.constant 0 : i32
    return %arg0, %c0_i32, %c0_i32_0 : i32, i32, i32
  }
  func.func @transform_5(%arg0: i32) -> (i32, i32, i32) {
    %c0_i32 = arith.constant 0 : i32
    %c0_i32_0 = arith.constant 0 : i32
    %c0_i32_1 = arith.constant 0 : i32
    return %arg0, %c0_i32, %c0_i32_0 : i32, i32, i32
  }
}

</mosaic_0001>

<llo_original>
// kernel: tpu_custom_call.1
$region0: #{tpu_custom_call.1}
  #allocation0 [shape = 'u32[]', space=smem, size = 0x4, offset = 0x4, fixed_abs, tag = 'smem constant byte address 0x4 - core index']
  #allocation1 [shape = 'u32[144,128]{1,0:T(1,128)}', space=vmem, size = 0x12000, scoped, tag = 'internal scratch']
  %s0 = inlined_call_operand.vmem [shape: f32[8,36], index: 0, kind: input, shape index: {}]
  %s1 = inlined_call_operand.vmem [shape: f32[8,1], index: 1, kind: input, shape index: {}]
  %s2 = inlined_call_operand.hbm [shape: f32[36,512], index: 2, kind: input, shape index: {}]
  %s3 = inlined_call_operand.hbm [shape: f32[8,512], index: 3, kind: output, shape index: {0}]
  %s4 = inlined_call_operand.vmem [shape: f32[1,8,1], index: 4, kind: output, shape index: {1}]
  %s5 = inlined_call_operand.vmem [shape: f32[1,8,1], index: 5, kind: output, shape index: {2}]
  %6 = xla_tuple %s3, %s4, %s5
  %s7 = sld [smem:[#allocation0]]
  $region42: #{tpu_custom_call.1} parent=0
    _
  %s9 = ssub.s32 1, %s7
  %s10 = scalar_select 0, %s9, %s7
  $region1: #{tpu_custom_call.1} parent=0
    #allocation2 [shape = 'u8[81920]{0}', space=vmem, size = 0x14000, scoped, tag = 'input window, operand 2, single buffered']
    #allocation3 [shape = 's32[1]{0}', space=sflag, size = 0x4, scoped, tag = 'scoped memory for tpu_custom_call.1']
    #allocation4 [shape = 's32[1]{0}', space=sflag, size = 0x4, scoped, tag = 'scoped memory for tpu_custom_call.1']
    #allocation5 [shape = 'u8[16384]{0}', space=vmem, size = 0x4000, scoped, tag = 'output window, operand 0, single buffered']
    %11 = vsyncpa [#allocation3], 0
    %12 = vsyncpa [#allocation4], 0
    // Predicated region
    $region2: #{tpu_custom_call.1} parent=1 // pred_check
      _
    $region3: #{tpu_custom_call.1} parent=1 // pred_check_branch
      %14 = sbr.rel (0) target = $region5
    $region4: #{tpu_custom_call.1} parent=1 // pred_region
      _
    $region5: #{tpu_custom_call.1} parent=1 // pred_fallthru
      _
    // Predicated region
    $region6: #{tpu_custom_call.1} parent=1 // pred_check
      _
    $region7: #{tpu_custom_call.1} parent=1 // pred_check_branch
      %16 = sbr.rel (0) target = $region9
    $region8: #{tpu_custom_call.1} parent=1 // pred_region
      _
    $region9: #{tpu_custom_call.1} parent=1 // pred_fallthru
      _
    // Predicated region
    $region10: #{tpu_custom_call.1} parent=1 // pred_check
      _
    $region11: #{tpu_custom_call.1} parent=1 // pred_check_branch
      %18 = sbr.rel (0) target = $region13
    $region12: #{tpu_custom_call.1} parent=1 // pred_region
      %s20 = ssub.s32 2560, 2560
      %21 = vsyncadd [#allocation3], %s20
      %s22 = sshll.u32 [#allocation2], 4
      %s23 = int_to_ptr.vmem [resolvable:$true] %s22
      %28 = dma.hbm_to_vmem [thread:$0]  %s2, 2560, %s23, [#allocation3], 512, 512, 32
    $region13: #{tpu_custom_call.1} parent=1 // pred_fallthru
      _
    // Predicated region
    $region14: #{tpu_custom_call.1} parent=1 // pred_check
      _
    $region15: #{tpu_custom_call.1} parent=1 // pred_check_branch
      %30 = sbr.rel (0) target = $region17
    $region16: #{tpu_custom_call.1} parent=1 // pred_region
      %31 = dma.done [#allocation3], 2560
    $region17: #{tpu_custom_call.1} parent=1 // pred_fallthru
      _
    %v32 = vld [vmem:[%s0] sm:$0xff]
    %v33 = vld [vmem:[#allocation2] sm:$0xff]
    %v34 = vld [vmem:[#allocation2 + $0x8] sm:$0xff]
    %v35 = vld [vmem:[#allocation2 + $0x10] sm:$0xff]
    %v36 = vld [vmem:[#allocation2 + $0x18] sm:$0xff]
    %v37 = vld [vmem:[#allocation2 + $0x20] sm:$0xff]
    %v38 = vld [vmem:[#allocation2 + $0x28] sm:$0xff]
    %v39 = vld [vmem:[#allocation2 + $0x30] sm:$0xff]
    %v40 = vld [vmem:[#allocation2 + $0x38] sm:$0xff]
    %v41 = vld [vmem:[#allocation2 + $0x40] sm:$0xff]
    %v42 = vld [vmem:[#allocation2 + $0x48] sm:$0xff]
    %v43 = vld [vmem:[#allocation2 + $0x50] sm:$0xff]
    %v44 = vld [vmem:[#allocation2 + $0x58] sm:$0xff]
    %v45 = vld [vmem:[#allocation2 + $0x60] sm:$0xff]
    %v46 = vld [vmem:[#allocation2 + $0x68] sm:$0xff]
    %v47 = vld [vmem:[#allocation2 + $0x70] sm:$0xff]
    %v48 = vld [vmem:[#allocation2 + $0x78] sm:$0xff]
    %v49 = vld [vmem:[#allocation2 + $0x80] sm:$0xf]
    %v50 = vld [vmem:[#allocation2 + $0x88] sm:$0xf]
    %v51 = vld [vmem:[#allocation2 + $0x90] sm:$0xf]
    %v52 = vld [vmem:[#allocation2 + $0x98] sm:$0xf]
    %v53 = vld [vmem:[%s1] sm:$0xff]
    %55 = vset.pattern.permute.xlu0 0
    %56 = vperm.xlu0 %55, %v53
    %v57 = vpop.permute.xlu0 %56
    %vm59 = vcmask 293888
    %v61 = vsel %vm59, %v32, 0
    %vm63 = vcmask 1043456
    %v65 = vsel %vm63, %v49, 0
    %v68 = vsel %vm63, %v50, 0
    %v71 = vsel %vm63, %v51, 0
    %v74 = vsel %vm63, %v52, 0
    %76 = vmatprep.subr.mxu0 %v34
    %77 = vmatpush1.msra.mxu0 %v33
    %78 = vmatprep.subr.mxu0 %v38
    %79 = vmatpush1.msra.mxu0 %v37
    %80 = vmatprep.subr.mxu0 %v42
    %81 = vmatpush1.msra.mxu0 %v41
    %82 = vmatprep.subr.mxu0 %v46
    %83 = vmatpush1.msra.mxu0 %v45
    %84 = vmatprep.subr.mxu0 %v68
    %85 = vmatpush1.msra.mxu0 %v65
    %86 = vmatprep.subr.mxu0 0.0
    %87 = vmatpush1.msra.mxu0 0.0
    %88 = vmatprep.subr.mxu0 0.0
    %89 = vmatpush1.msra.mxu0 0.0
    %90 = vmatprep.subr.mxu0 0.0
    %91 = vmatpush1.msra.mxu0 0.0
    %92 = vmatprep.subr.mxu0 0.0
    %93 = vmatpush1.msra.mxu0 0.0
    %94 = vmatprep.subr.mxu0 0.0
    %95 = vmatpush1.msra.mxu0 0.0
    %96 = vmatprep.subr.mxu0 0.0
    %97 = vmatpush1.msra.mxu0 0.0
    %98 = vmatprep.subr.mxu0 0.0
    %99 = vmatpush1.msra.mxu0 0.0
    %100 = vmatprep.subr.mxu0 0.0
    %101 = vmatpush1.msra.mxu0 0.0
    %102 = vmatprep.subr.mxu0 0.0
    %103 = vmatpush1.msra.mxu0 0.0
    %104 = vmatprep.subr.mxu0 0.0
    %105 = vmatpush1.msra.mxu0 0.0
    %106 = vmatprep.subr.mxu0 0.0
    %107 = vmatpush1.msra.mxu0 0.0
    %108 = vmatprep.subr.mxu0 0.0
    %109 = vmatpush1.msra.mxu0 0.0
    %110 = vmatprep.subr.mxu0 0.0
    %111 = vmatpush1.msra.mxu0 0.0
    %112 = vmatprep.subr.mxu0 0.0
    %113 = vmatpush1.msra.mxu0 0.0
    %114 = vmatprep.subr.mxu0 0.0
    %115 = vmatpush1.msra.mxu0 0.0
    %116 = vmatprep.subr.mxu0 0.0
    %117 = vmatpush1.msra.mxu0 0.0
    %118 = vmatprep.subr.mxu0 0.0
    %119 = vmatpush1.msra.mxu0 0.0
    %120 = vmatprep.subr.mxu0 0.0
    %121 = vmatpush1.msra.mxu0 0.0
    %122 = vmatprep.subr.mxu0 0.0
    %123 = vmatpush1.msra.mxu0 0.0
    %124 = vmatprep.subr.mxu0 0.0
    %125 = vmatpush1.msra.mxu0 0.0
    %126 = vmatprep.subr.mxu0 0.0
    %127 = vmatpush1.msra.mxu0 0.0
    %128 = vmatprep.subr.mxu0 0.0
    %129 = vmatpush1.msra.mxu0 0.0
    %130 = vmatprep.subr.mxu0 0.0
    %131 = vmatpush1.msra.mxu0 0.0
    %132 = vmatprep.subr.mxu0 0.0
    %133 = vmatpush1.msra.mxu0 0.0
    %134 = vmatprep.subr.mxu0 0.0
    %135 = vmatpush1.msra.mxu0 0.0
    %136 = vmatprep.subr.mxu0 0.0
    %137 = vmatpush1.msra.mxu0 0.0
    %138 = vmatprep.subr.mxu0 0.0
    %139 = vmatpush1.msra.mxu0 0.0
    %140 = vmatprep.mubr.f32.mxu0 0.0
    %141 = vmatmul.mubr.f32.gmra.mrb[0].mxu0 %v61
    %v142 = vpop.f32.mrb[0].mxu0
    %v143 = vadd.f32 %v57, %v142
    %v144 = vpop.f32.mrb[0].mxu0
    %v145 = vadd.f32 %v57, %v144
    %146 = vdwg.mxu0
    %147 = vmatprep.subr.mxu0 %v36
    %148 = vmatpush1.msra.mxu0 %v35
    %149 = vmatprep.subr.mxu0 %v40
    %150 = vmatpush1.msra.mxu0 %v39
    %151 = vmatprep.subr.mxu0 %v44
    %152 = vmatpush1.msra.mxu0 %v43
    %153 = vmatprep.subr.mxu0 %v48
    %154 = vmatpush1.msra.mxu0 %v47
    %155 = vmatprep.subr.mxu0 %v74
    %156 = vmatpush1.msra.mxu0 %v71
    %157 = vmatprep.subr.mxu0 0.0
    %158 = vmatpush1.msra.mxu0 0.0
    %159 = vmatprep.subr.mxu0 0.0
    %160 = vmatpush1.msra.mxu0 0.0
    %161 = vmatprep.subr.mxu0 0.0
    %162 = vmatpush1.msra.mxu0 0.0
    %163 = vmatprep.subr.mxu0 0.0
    %164 = vmatpush1.msra.mxu0 0.0
    %165 = vmatprep.subr.mxu0 0.0
    %166 = vmatpush1.msra.mxu0 0.0
    %167 = vmatprep.subr.mxu0 0.0
    %168 = vmatpush1.msra.mxu0 0.0
    %169 = vmatprep.subr.mxu0 0.0
    %170 = vmatpush1.msra.mxu0 0.0
    %171 = vmatprep.subr.mxu0 0.0
    %172 = vmatpush1.msra.mxu0 0.0
    %173 = vmatprep.subr.mxu0 0.0
    %174 = vmatpush1.msra.mxu0 0.0
    %175 = vmatprep.subr.mxu0 0.0
    %176 = vmatpush1.msra.mxu0 0.0
    %177 = vmatprep.subr.mxu0 0.0
    %178 = vmatpush1.msra.mxu0 0.0
    %179 = vmatprep.subr.mxu0 0.0
    %180 = vmatpush1.msra.mxu0 0.0
    %181 = vmatprep.subr.mxu0 0.0
    %182 = vmatpush1.msra.mxu0 0.0
    %183 = vmatprep.subr.mxu0 0.0
    %184 = vmatpush1.msra.mxu0 0.0
    %185 = vmatprep.subr.mxu0 0.0
    %186 = vmatpush1.msra.mxu0 0.0
    %187 = vmatprep.subr.mxu0 0.0
    %188 = vmatpush1.msra.mxu0 0.0
    %189 = vmatprep.subr.mxu0 0.0
    %190 = vmatpush1.msra.mxu0 0.0
    %191 = vmatprep.subr.mxu0 0.0
    %192 = vmatpush1.msra.mxu0 0.0
    %193 = vmatprep.subr.mxu0 0.0
    %194 = vmatpush1.msra.mxu0 0.0
    %195 = vmatprep.subr.mxu0 0.0
    %196 = vmatpush1.msra.mxu0 0.0
    %197 = vmatprep.subr.mxu0 0.0
    %198 = vmatpush1.msra.mxu0 0.0
    %199 = vmatprep.subr.mxu0 0.0
    %200 = vmatpush1.msra.mxu0 0.0
    %201 = vmatprep.subr.mxu0 0.0
    %202 = vmatpush1.msra.mxu0 0.0
    %203 = vmatprep.subr.mxu0 0.0
    %204 = vmatpush1.msra.mxu0 0.0
    %205 = vmatprep.subr.mxu0 0.0
    %206 = vmatpush1.msra.mxu0 0.0
    %207 = vmatprep.subr.mxu0 0.0
    %208 = vmatpush1.msra.mxu0 0.0
    %209 = vmatprep.subr.mxu0 0.0
    %210 = vmatpush1.msra.mxu0 0.0
    %211 = vmatprep.mubr.f32.mxu0 0.0
    %212 = vmatmul.mubr.f32.gmra.mrb[0].mxu0 %v61
    %v213 = vpop.f32.mrb[0].mxu0
    %v214 = vadd.f32 %v57, %v213
    %v215 = vpop.f32.mrb[0].mxu0
    %v216 = vadd.f32 %v57, %v215
    %217 = vdwg.mxu0
    %v218 = vmax.f32 %v143, 0.0
    %v219 = vmax.f32 %v145, 0.0
    %v220 = vmax.f32 %v214, 0.0
    %v221 = vmax.f32 %v216, 0.0
    %222 = vst [vmem:[#allocation5] sm:$0xff] %v218
    %223 = vst [vmem:[#allocation5 + $0x8] sm:$0xff] %v219
    %224 = vst [vmem:[#allocation5 + $0x10] sm:$0xff] %v220
    %225 = vst [vmem:[#allocation5 + $0x18] sm:$0xff] %v221
    %v226 = vadd.f32 %v218, %v219
    %v227 = vadd.f32 %v226, %v220
    %v228 = vadd.f32 %v227, %v221
    %229 = vadd.xlane.f32.xlu0 %v228
    %v230 = vpop.xlane.xlu0 %229
    %vm231 = vcmask 7168
    %232 = vst.msk [vmem:[%s4] sm:$0xff] %vm231, %v230
    %v233 = vmul.f32 %v218, %v218
    %v234 = vmul.f32 %v219, %v219
    %v235 = vmul.f32 %v220, %v220
    %v236 = vmul.f32 %v221, %v221
    %v237 = vadd.f32 %v233, %v234
    %v238 = vadd.f32 %v237, %v235
    %v239 = vadd.f32 %v238, %v236
    %240 = vadd.xlane.f32.xlu0 %v239
    %v241 = vpop.xlane.xlu0 %240
    %242 = vst.msk [vmem:[%s5] sm:$0xff] %vm231, %v241
    // Predicated region
    $region18: #{tpu_custom_call.1} parent=1 // pred_check
      _
    $region19: #{tpu_custom_call.1} parent=1 // pred_check_branch
      %244 = sbr.rel (0) target = $region21
    $region20: #{tpu_custom_call.1} parent=1 // pred_region
      %s246 = ssub.s32 512, 512
      %247 = vsyncadd [#allocation4], %s246
      %s249 = sshll.u32 [#allocation5], 4
      %s250 = int_to_ptr.vmem [resolvable:$true] %s249
      %252 = dma.vmem_to_hbm [thread:$0]  %s250, 512, %s3, [#allocation4]
    $region21: #{tpu_custom_call.1} parent=1 // pred_fallthru
      _
    // Predicated region
    $region22: #{tpu_custom_call.1} parent=1 // pred_check
      _
    $region23: #{tpu_custom_call.1} parent=1 // pred_check_branch
      %254 = sbr.rel (0) target = $region25
    $region24: #{tpu_custom_call.1} parent=1 // pred_region
      _
    $region25: #{tpu_custom_call.1} parent=1 // pred_fallthru
      _
    // Predicated region
    $region26: #{tpu_custom_call.1} parent=1 // pred_check
      _
    $region27: #{tpu_custom_call.1} parent=1 // pred_check_branch
      %256 = sbr.rel (0) target = $region29
    $region28: #{tpu_custom_call.1} parent=1 // pred_region
      _
    $region29: #{tpu_custom_call.1} parent=1 // pred_fallthru
      _
    // Predicated region
    $region30: #{tpu_custom_call.1} parent=1 // pred_check
      _
    $region31: #{tpu_custom_call.1} parent=1 // pred_check_branch
      %258 = sbr.rel (0) target = $region33
    $region32: #{tpu_custom_call.1} parent=1 // pred_region
      %259 = dma.done [#allocation4], 512
    $region33: #{tpu_custom_call.1} parent=1 // pred_fallthru
      _
    // Predicated region
    $region34: #{tpu_custom_call.1} parent=1 // pred_check
      _
    $region35: #{tpu_custom_call.1} parent=1 // pred_check_branch
      %261 = sbr.rel (0) target = $region37
    $region36: #{tpu_custom_call.1} parent=1 // pred_region
      _
    $region37: #{tpu_custom_call.1} parent=1 // pred_fallthru
      _
    // Predicated region
    $region38: #{tpu_custom_call.1} parent=1 // pred_check
      _
    $region39: #{tpu_custom_call.1} parent=1 // pred_check_branch
      %263 = sbr.rel (0) target = $region41
    $region40: #{tpu_custom_call.1} parent=1 // pred_region
      _
    $region41: #{tpu_custom_call.1} parent=1 // pred_fallthru
      _
    %264 = vsyncpa [#allocation3], 1
    %265 = vsyncpa [#allocation4], 1

</llo_original>
